<compile_context>
chip_gen: v6e
topology: v6e:2x2x1
jax: 0.10.0
libtpu: 0.0.40
codegen_flags: <defaults>
</compile_context>

<pallas_src>
import jax
import jax.numpy as jnp
import numpy as np
from jax.experimental import pallas as pl
from jax.experimental.pallas import tpu as pltpu


_LANE = 128
# Max voxels per tile: Cin(=4) * 16384 * 4 B = 256 KiB per input buffer
# (double-buffered in + out ~= 1 MiB) -> comfortable on v5e/v6e/v7x VMEM.
_MAX_S_TILE = 16384


def _round_up(x, m):
    return (x + m - 1) // m * m


def _conv1x1x1_kernel(x_ref, w_ref, b_ref, o_ref):
    """Per-voxel channel mix on the VPU.

    x_ref: (Cin,  S_TILE) f32 VMEM -- one spatial tile of one batch element
    w_ref: (Cout, Cin)    f32 SMEM -- resident for the whole call
    b_ref: (Cout,)        f32 SMEM
    o_ref: (Cout, S_TILE) f32 VMEM
    """
    cin = x_ref.shape[0]
    cout = o_ref.shape[0]
    x = x_ref[...]  # single lane-dense load of the whole tile

    # num_classes is small and static -> fully unrolled VPU multiply-adds.
    # TODO(synk): if num_classes were large, switch to an MXU jnp.dot with
    # channels padded to a multiple of 128.
    for co in range(cout):
        acc = x[0:1, :] * w_ref[co, 0]
        for ci in range(1, cin):
            acc = acc + x[ci:ci + 1, :] * w_ref[co, ci]
        o_ref[co:co + 1, :] = acc + b_ref[co]  # lane-dense store


def classifier_forward(x_ncdhw, weight, bias):
    """Forward pass of the PyTorch `classifier` module.

    Args:
      x_ncdhw: (N, C_in, D, H, W) float32
      weight:  (C_out, C_in, 1, 1, 1) float32  (PyTorch Conv3d weight layout)
      bias:    (C_out,) float32
    Returns:
      (N, C_out, D, H, W) float32
    """
    N, Cin, D, H, W = x_ncdhw.shape
    Cout = weight.shape[0]
    S = D * H * W

    # Native layout: just collapse the spatial dims (contiguous -> free).
    x3 = x_ncdhw.reshape(N, Cin, S)
    w2d = weight.reshape(Cout, Cin)
    b1d = bias.reshape(Cout)

    # Spatial (lane) tile: multiple of 128, capped for VMEM headroom.
    s128 = _round_up(S, _LANE)
    s_tile = min(s128, _MAX_S_TILE)
    s_pad = _round_up(S, s_tile)
    if s_pad != S:
        x3 = jnp.pad(x3, ((0, 0), (0, 0), (0, s_pad - S)))

    grid = (N, s_pad // s_tile)

    cost = pl.CostEstimate(
        flops=2 * N * S * Cin * Cout,
        transcendentals=0,
        bytes_accessed=4 * (N * Cin * S + N * Cout * S + Cout * Cin + Cout),
    )

    out3 = pl.pallas_call(
        _conv1x1x1_kernel,
        out_shape=jax.ShapeDtypeStruct((N, Cout, s_pad), x_ncdhw.dtype),
        grid_spec=pltpu.PrefetchScalarGridSpec(
            num_scalar_prefetch=0,
            grid=grid,
            in_specs=[
                # (batch squeezed, all channels, one spatial tile)
                pl.BlockSpec((None, Cin, s_tile), lambda n, s: (n, 0, s)),
                # tiny weight / bias live in SMEM, DMA'd once for the call
                pl.BlockSpec(memory_space=pltpu.MemorySpace.SMEM),
                pl.BlockSpec(memory_space=pltpu.MemorySpace.SMEM),
            ],
            out_specs=pl.BlockSpec((None, Cout, s_tile), lambda n, s: (n, 0, s)),
        ),
        compiler_params=pltpu.CompilerParams(
            dimension_semantics=("parallel", "parallel"),
        ),
        cost_estimate=cost,
    )(x3, w2d, b1d)

    if s_pad != S:
        out3 = out3[:, :, :S]
    return out3.reshape(N, Cout, D, H, W)


if __name__ == "__main__":
    key = jax.random.PRNGKey(0)
    k_x, k_w, k_b = jax.random.split(key, 3)

    num_classes = 4
    N, D, H, W = 2, 8, 8, 8

    # Deterministic "PyTorch-like" init: uniform(-bound, bound), bound = 1/sqrt(fan_in)
    fan_in = num_classes * 1 * 1 * 1
    bound = 1.0 / np.sqrt(fan_in)
    x = jax.random.normal(k_x, (N, num_classes, D, H, W), dtype=jnp.float32)
    weight = jax.random.uniform(
        k_w, (num_classes, num_classes, 1, 1, 1),
        minval=-bound, maxval=bound, dtype=jnp.float32)
    bias = jax.random.uniform(
        k_b, (num_classes,), minval=-bound, maxval=bound, dtype=jnp.float32)

    out = jax.block_until_ready(classifier_forward(x, weight, bias))

    # Cross-check against a plain-JAX reference of the 1x1x1 conv.
    ref = jnp.einsum("ncdhw,oc->nodhw", x, weight.reshape(num_classes, num_classes)) \
          + bias[None, :, None, None, None]
    np.testing.assert_allclose(np.asarray(out), np.asarray(ref), rtol=1e-5, atol=1e-5)

    print("KERNEL_OK")
</pallas_src>

<mosaic_0001>
module attributes {stable_mosaic.version = 11 : i64} {
  func.func @_conv1x1x1_kernel(%arg0: i32, %arg1: i32, %arg2: memref<1x4x512xf32, #tpu.memory_space<vmem>>, %arg3: memref<4x4xf32, #tpu.memory_space<smem>>, %arg4: memref<4xf32, #tpu.memory_space<smem>>, %arg5: memref<1x4x512xf32, #tpu.memory_space<vmem>>) attributes {dimension_semantics = [#tpu.dimension_semantics<parallel>, #tpu.dimension_semantics<parallel>], iteration_bounds = array<i64: 2, 1>, scalar_prefetch = 0 : i64, scratch_operands = 0 : i64, tpu.core_type = #tpu.core_type<tc>, window_params = [{transform_indices = @transform_0, window_bounds = array<i64: 1, 4, 512>}, {transform_indices = @transform_1, window_bounds = array<i64: 4, 4>}, {transform_indices = @transform_2, window_bounds = array<i64: 4>}, {transform_indices = @transform_3, window_bounds = array<i64: 1, 4, 512>}]} {
    %c0 = arith.constant 0 : index
    %c0_0 = arith.constant 0 : index
    %c0_1 = arith.constant 0 : index
    %0 = vector.load %arg2[%c0, %c0_0, %c0_1] : memref<1x4x512xf32, #tpu.memory_space<vmem>>, vector<1x4x512xf32>
    %1 = vector.shape_cast %0 : vector<1x4x512xf32> to vector<4x512xf32>
    %2 = vector.extract_strided_slice %1 {offsets = [0, 0], sizes = [1, 512], strides = [1, 1]} : vector<4x512xf32> to vector<1x512xf32>
    %c0_2 = arith.constant 0 : index
    %c0_3 = arith.constant 0 : index
    %3 = memref.load %arg3[%c0_2, %c0_3] : memref<4x4xf32, #tpu.memory_space<smem>>
    %4 = vector.broadcast %3 : f32 to vector<1x512xf32>
    %5 = arith.mulf %2, %4 : vector<1x512xf32>
    %6 = vector.extract_strided_slice %1 {offsets = [1, 0], sizes = [1, 512], strides = [1, 1]} : vector<4x512xf32> to vector<1x512xf32>
    %c0_4 = arith.constant 0 : index
    %c1 = arith.constant 1 : index
    %7 = memref.load %arg3[%c0_4, %c1] : memref<4x4xf32, #tpu.memory_space<smem>>
    %8 = vector.broadcast %7 : f32 to vector<1x512xf32>
    %9 = arith.mulf %6, %8 : vector<1x512xf32>
    %10 = arith.addf %5, %9 : vector<1x512xf32>
    %11 = vector.extract_strided_slice %1 {offsets = [2, 0], sizes = [1, 512], strides = [1, 1]} : vector<4x512xf32> to vector<1x512xf32>
    %c0_5 = arith.constant 0 : index
    %c2 = arith.constant 2 : index
    %12 = memref.load %arg3[%c0_5, %c2] : memref<4x4xf32, #tpu.memory_space<smem>>
    %13 = vector.broadcast %12 : f32 to vector<1x512xf32>
    %14 = arith.mulf %11, %13 : vector<1x512xf32>
    %15 = arith.addf %10, %14 : vector<1x512xf32>
    %16 = vector.extract_strided_slice %1 {offsets = [3, 0], sizes = [1, 512], strides = [1, 1]} : vector<4x512xf32> to vector<1x512xf32>
    %c0_6 = arith.constant 0 : index
    %c3 = arith.constant 3 : index
    %17 = memref.load %arg3[%c0_6, %c3] : memref<4x4xf32, #tpu.memory_space<smem>>
    %18 = vector.broadcast %17 : f32 to vector<1x512xf32>
    %19 = arith.mulf %16, %18 : vector<1x512xf32>
    %20 = arith.addf %15, %19 : vector<1x512xf32>
    %c0_7 = arith.constant 0 : index
    %21 = memref.load %arg4[%c0_7] : memref<4xf32, #tpu.memory_space<smem>>
    %22 = vector.broadcast %21 : f32 to vector<1x512xf32>
    %23 = arith.addf %20, %22 : vector<1x512xf32>
    %c0_8 = arith.constant 0 : index
    %c0_9 = arith.constant 0 : index
    %c0_10 = arith.constant 0 : index
    %24 = vector.load %arg5[%c0_8, %c0_9, %c0_10] : memref<1x4x512xf32, #tpu.memory_space<vmem>>, vector<1x1x512xf32>
    %25 = vector.shape_cast %24 : vector<1x1x512xf32> to vector<1x512xf32>
    %26 = vector.shape_cast %23 : vector<1x512xf32> to vector<1x1x512xf32>
    tpu.vector_store %arg5[%c0_8, %c0_9, %c0_10], %26 {strides = array<i32>} : memref<1x4x512xf32, #tpu.memory_space<vmem>>, vector<1x1x512xf32>,
    %27 = vector.extract_strided_slice %1 {offsets = [0, 0], sizes = [1, 512], strides = [1, 1]} : vector<4x512xf32> to vector<1x512xf32>
    %c1_11 = arith.constant 1 : index
    %c0_12 = arith.constant 0 : index
    %28 = memref.load %arg3[%c1_11, %c0_12] : memref<4x4xf32, #tpu.memory_space<smem>>
    %29 = vector.broadcast %28 : f32 to vector<1x512xf32>
    %30 = arith.mulf %27, %29 : vector<1x512xf32>
    %31 = vector.extract_strided_slice %1 {offsets = [1, 0], sizes = [1, 512], strides = [1, 1]} : vector<4x512xf32> to vector<1x512xf32>
    %c1_13 = arith.constant 1 : index
    %c1_14 = arith.constant 1 : index
    %32 = memref.load %arg3[%c1_13, %c1_14] : memref<4x4xf32, #tpu.memory_space<smem>>
    %33 = vector.broadcast %32 : f32 to vector<1x512xf32>
    %34 = arith.mulf %31, %33 : vector<1x512xf32>
    %35 = arith.addf %30, %34 : vector<1x512xf32>
    %36 = vector.extract_strided_slice %1 {offsets = [2, 0], sizes = [1, 512], strides = [1, 1]} : vector<4x512xf32> to vector<1x512xf32>
    %c1_15 = arith.constant 1 : index
    %c2_16 = arith.constant 2 : index
    %37 = memref.load %arg3[%c1_15, %c2_16] : memref<4x4xf32, #tpu.memory_space<smem>>
    %38 = vector.broadcast %37 : f32 to vector<1x512xf32>
    %39 = arith.mulf %36, %38 : vector<1x512xf32>
    %40 = arith.addf %35, %39 : vector<1x512xf32>
    %41 = vector.extract_strided_slice %1 {offsets = [3, 0], sizes = [1, 512], strides = [1, 1]} : vector<4x512xf32> to vector<1x512xf32>
    %c1_17 = arith.constant 1 : index
    %c3_18 = arith.constant 3 : index
    %42 = memref.load %arg3[%c1_17, %c3_18] : memref<4x4xf32, #tpu.memory_space<smem>>
    %43 = vector.broadcast %42 : f32 to vector<1x512xf32>
    %44 = arith.mulf %41, %43 : vector<1x512xf32>
    %45 = arith.addf %40, %44 : vector<1x512xf32>
    %c1_19 = arith.constant 1 : index
    %46 = memref.load %arg4[%c1_19] : memref<4xf32, #tpu.memory_space<smem>>
    %47 = vector.broadcast %46 : f32 to vector<1x512xf32>
    %48 = arith.addf %45, %47 : vector<1x512xf32>
    %c0_20 = arith.constant 0 : index
    %c1_21 = arith.constant 1 : index
    %c0_22 = arith.constant 0 : index
    %49 = vector.load %arg5[%c0_20, %c1_21, %c0_22] : memref<1x4x512xf32, #tpu.memory_space<vmem>>, vector<1x1x512xf32>
    %50 = vector.shape_cast %49 : vector<1x1x512xf32> to vector<1x512xf32>
    %51 = vector.shape_cast %48 : vector<1x512xf32> to vector<1x1x512xf32>
    tpu.vector_store %arg5[%c0_20, %c1_21, %c0_22], %51 {strides = array<i32>} : memref<1x4x512xf32, #tpu.memory_space<vmem>>, vector<1x1x512xf32>,
    %52 = vector.extract_strided_slice %1 {offsets = [0, 0], sizes = [1, 512], strides = [1, 1]} : vector<4x512xf32> to vector<1x512xf32>
    %c2_23 = arith.constant 2 : index
    %c0_24 = arith.constant 0 : index
    %53 = memref.load %arg3[%c2_23, %c0_24] : memref<4x4xf32, #tpu.memory_space<smem>>
    %54 = vector.broadcast %53 : f32 to vector<1x512xf32>
    %55 = arith.mulf %52, %54 : vector<1x512xf32>
    %56 = vector.extract_strided_slice %1 {offsets = [1, 0], sizes = [1, 512], strides = [1, 1]} : vector<4x512xf32> to vector<1x512xf32>
    %c2_25 = arith.constant 2 : index
    %c1_26 = arith.constant 1 : index
    %57 = memref.load %arg3[%c2_25, %c1_26] : memref<4x4xf32, #tpu.memory_space<smem>>
    %58 = vector.broadcast %57 : f32 to vector<1x512xf32>
    %59 = arith.mulf %56, %58 : vector<1x512xf32>
    %60 = arith.addf %55, %59 : vector<1x512xf32>
    %61 = vector.extract_strided_slice %1 {offsets = [2, 0], sizes = [1, 512], strides = [1, 1]} : vector<4x512xf32> to vector<1x512xf32>
    %c2_27 = arith.constant 2 : index
    %c2_28 = arith.constant 2 : index
    %62 = memref.load %arg3[%c2_27, %c2_28] : memref<4x4xf32, #tpu.memory_space<smem>>
    %63 = vector.broadcast %62 : f32 to vector<1x512xf32>
    %64 = arith.mulf %61, %63 : vector<1x512xf32>
    %65 = arith.addf %60, %64 : vector<1x512xf32>
    %66 = vector.extract_strided_slice %1 {offsets = [3, 0], sizes = [1, 512], strides = [1, 1]} : vector<4x512xf32> to vector<1x512xf32>
    %c2_29 = arith.constant 2 : index
    %c3_30 = arith.constant 3 : index
    %67 = memref.load %arg3[%c2_29, %c3_30] : memref<4x4xf32, #tpu.memory_space<smem>>
    %68 = vector.broadcast %67 : f32 to vector<1x512xf32>
    %69 = arith.mulf %66, %68 : vector<1x512xf32>
    %70 = arith.addf %65, %69 : vector<1x512xf32>
    %c2_31 = arith.constant 2 : index
    %71 = memref.load %arg4[%c2_31] : memref<4xf32, #tpu.memory_space<smem>>
    %72 = vector.broadcast %71 : f32 to vector<1x512xf32>
    %73 = arith.addf %70, %72 : vector<1x512xf32>
    %c0_32 = arith.constant 0 : index
    %c2_33 = arith.constant 2 : index
    %c0_34 = arith.constant 0 : index
    %74 = vector.load %arg5[%c0_32, %c2_33, %c0_34] : memref<1x4x512xf32, #tpu.memory_space<vmem>>, vector<1x1x512xf32>
    %75 = vector.shape_cast %74 : vector<1x1x512xf32> to vector<1x512xf32>
    %76 = vector.shape_cast %73 : vector<1x512xf32> to vector<1x1x512xf32>
    tpu.vector_store %arg5[%c0_32, %c2_33, %c0_34], %76 {strides = array<i32>} : memref<1x4x512xf32, #tpu.memory_space<vmem>>, vector<1x1x512xf32>,
    %77 = vector.extract_strided_slice %1 {offsets = [0, 0], sizes = [1, 512], strides = [1, 1]} : vector<4x512xf32> to vector<1x512xf32>
    %c3_35 = arith.constant 3 : index
    %c0_36 = arith.constant 0 : index
    %78 = memref.load %arg3[%c3_35, %c0_36] : memref<4x4xf32, #tpu.memory_space<smem>>
    %79 = vector.broadcast %78 : f32 to vector<1x512xf32>
    %80 = arith.mulf %77, %79 : vector<1x512xf32>
    %81 = vector.extract_strided_slice %1 {offsets = [1, 0], sizes = [1, 512], strides = [1, 1]} : vector<4x512xf32> to vector<1x512xf32>
    %c3_37 = arith.constant 3 : index
    %c1_38 = arith.constant 1 : index
    %82 = memref.load %arg3[%c3_37, %c1_38] : memref<4x4xf32, #tpu.memory_space<smem>>
    %83 = vector.broadcast %82 : f32 to vector<1x512xf32>
    %84 = arith.mulf %81, %83 : vector<1x512xf32>
    %85 = arith.addf %80, %84 : vector<1x512xf32>
    %86 = vector.extract_strided_slice %1 {offsets = [2, 0], sizes = [1, 512], strides = [1, 1]} : vector<4x512xf32> to vector<1x512xf32>
    %c3_39 = arith.constant 3 : index
    %c2_40 = arith.constant 2 : index
    %87 = memref.load %arg3[%c3_39, %c2_40] : memref<4x4xf32, #tpu.memory_space<smem>>
    %88 = vector.broadcast %87 : f32 to vector<1x512xf32>
    %89 = arith.mulf %86, %88 : vector<1x512xf32>
    %90 = arith.addf %85, %89 : vector<1x512xf32>
    %91 = vector.extract_strided_slice %1 {offsets = [3, 0], sizes = [1, 512], strides = [1, 1]} : vector<4x512xf32> to vector<1x512xf32>
    %c3_41 = arith.constant 3 : index
    %c3_42 = arith.constant 3 : index
    %92 = memref.load %arg3[%c3_41, %c3_42] : memref<4x4xf32, #tpu.memory_space<smem>>
    %93 = vector.broadcast %92 : f32 to vector<1x512xf32>
    %94 = arith.mulf %91, %93 : vector<1x512xf32>
    %95 = arith.addf %90, %94 : vector<1x512xf32>
    %c3_43 = arith.constant 3 : index
    %96 = memref.load %arg4[%c3_43] : memref<4xf32, #tpu.memory_space<smem>>
    %97 = vector.broadcast %96 : f32 to vector<1x512xf32>
    %98 = arith.addf %95, %97 : vector<1x512xf32>
    %c0_44 = arith.constant 0 : index
    %c3_45 = arith.constant 3 : index
    %c0_46 = arith.constant 0 : index
    %99 = vector.load %arg5[%c0_44, %c3_45, %c0_46] : memref<1x4x512xf32, #tpu.memory_space<vmem>>, vector<1x1x512xf32>
    %100 = vector.shape_cast %99 : vector<1x1x512xf32> to vector<1x512xf32>
    %101 = vector.shape_cast %98 : vector<1x512xf32> to vector<1x1x512xf32>
    tpu.vector_store %arg5[%c0_44, %c3_45, %c0_46], %101 {strides = array<i32>} : memref<1x4x512xf32, #tpu.memory_space<vmem>>, vector<1x1x512xf32>,
    return
  }
  func.func @transform_0(%arg0: i32, %arg1: i32) -> (i32, i32, i32) {
    %c0_i32 = arith.constant 0 : i32
    %c0_i32_0 = arith.constant 0 : i32
    return %arg0, %c0_i32, %arg1 : i32, i32, i32
  }
  func.func @transform_1(%arg0: i32, %arg1: i32) -> (i32, i32) {
    %c0_i32 = arith.constant 0 : i32
    %c0_i32_0 = arith.constant 0 : i32
    %c0_i32_1 = arith.constant 0 : i32
    return %c0_i32, %c0_i32_0 : i32, i32
  }
  func.func @transform_2(%arg0: i32, %arg1: i32) -> i32 {
    %c0_i32 = arith.constant 0 : i32
    %c0_i32_0 = arith.constant 0 : i32
    return %c0_i32 : i32
  }
  func.func @transform_3(%arg0: i32, %arg1: i32) -> (i32, i32, i32) {
    %c0_i32 = arith.constant 0 : i32
    %c0_i32_0 = arith.constant 0 : i32
    return %arg0, %c0_i32, %arg1 : i32, i32, i32
  }
}

</mosaic_0001>

<llo_original>
// kernel: tpu_custom_call.1
$region0: #{tpu_custom_call.1}
  #allocation0 [shape = 'u32[]', space=smem, size = 0x4, offset = 0x4, fixed_abs, tag = 'smem constant byte address 0x4 - core index']
  #allocation1 [shape = 'u32[144,128]{1,0:T(1,128)}', space=vmem, size = 0x12000, scoped, tag = 'internal scratch']
  %s0 = inlined_call_operand.hbm [shape: f32[2,4,512], index: 0, kind: input, shape index: {}]
  %s1 = inlined_call_operand.hbm [shape: f32[4,4], index: 1, kind: input, shape index: {}]
  %s2 = inlined_call_operand.vmem [shape: f32[4], index: 2, kind: input, shape index: {}]
  %s3 = inlined_call_operand.hbm [shape: f32[2,4,512], index: 3, kind: output, shape index: {}]
  %s4 = sld [smem:[#allocation0]]
  $region57: #{tpu_custom_call.1} parent=0
    _
  %s6 = ssub.s32 1, %s4
  %s7 = scalar_select 0, %s6, %s4
  $region1: #{tpu_custom_call.1} parent=0
    #allocation2 [shape = 'u8[16384]{0}', space=vmem, size = 0x4000, scoped, tag = 'input window, operand 0']
    #allocation3 [shape = 's32[2]{0}', space=sflag, size = 0x8, scoped, tag = 'scoped memory for tpu_custom_call.1']
    #allocation4 [shape = 's32[2]{0}', space=sflag, size = 0x8, scoped, tag = 'scoped memory for tpu_custom_call.1']
    #allocation5 [shape = 's32[2]{0}', space=sflag, size = 0x8, scoped, tag = 'scoped memory for tpu_custom_call.1']
    #allocation6 [shape = 's32[2]{0}', space=sflag, size = 0x8, scoped, tag = 'scoped memory for tpu_custom_call.1']
    #allocation7 [shape = 'u8[2048]{0}', space=smem, size = 0x800, scoped, tag = 'input window, operand 1, single buffered']
    #allocation8 [shape = 'u8[512]{0}', space=smem, size = 0x200, scoped, tag = 'input window, operand 2, single buffered']
    #allocation9 [shape = 'u8[16384]{0}', space=vmem, size = 0x4000, scoped, tag = 'output window, operand 0']
    %8 = vsyncpa [#allocation3], 0
    %s9 = scalar_lea.sflag [#allocation3], 1
    %10 = vsyncpa %s9, 0
    %11 = vsyncpa [#allocation5], 0
    %12 = vsyncpa [#allocation6], 0
    %13 = vsyncpa [#allocation4], 0
    %s14 = scalar_lea.sflag [#allocation4], 1
    %15 = vsyncpa %s14, 0
    loop: start=0, step=1, limit=4
    $region2: #{tpu_custom_call.1} parent=1 // loop_pre_header
      _
    $region3: #{tpu_custom_call.1} parent=1 // loop_header
      %s17 = sphi 0, %s21
      %p18 = scmp.ge.s32.totalorder %s17, 4
      %s24 = sphi 0, %s36
      %s25 = sphi 0, %s32
      %s26 = sphi 0, %s24
      %s27 = sphi 0, %s25
      %s28 = sphi 0, %s26
      %s29 = sphi 0, %s27
      %s41 = sphi 0, %s43
      %s44 = sphi 0, %s41
      %s45 = sphi 0, %s44
      %s61 = sphi 0, %s45
      %s65 = sphi 0, %s65
      %s67 = sphi 0, %s65
      %s68 = sphi 0, %s67
      %s82 = sphi 0, %s68
      %s86 = sphi 0, %s86
      %s88 = sphi 0, %s86
      %s89 = sphi 0, %s88
      %s103 = sphi 0, %s89
      %s111 = sphi 0, %s113
      %s114 = sphi 0, %s111
      %s115 = sphi 0, %s114
      %s131 = sphi 0, %s115
    $region4: #{tpu_custom_call.1} parent=1 // loop_header_branch
      %20 = sbr.rel (%p18) target = $region8
    $region5: #{tpu_custom_call.1} parent=1 // loop_body
      %s22 = ssub.s32 %s17, 1
      %s23 = ssub.s32 %s17, 2
      %s30 = sadd.s32 1, %s25
      %p31 = scmp.ge.s32.totalorder %s30, 1
      %s32 = scalar_select %p31, 0, %s30
      %s33 = sadd.s32 1, %s24
      %s34 = scalar_select %p31, %s33, %s24
      %p35 = scmp.ge.s32.totalorder %s34, 2
      %s36 = scalar_select %p35, 0, %s34
      %s37 = ssub.s32 %s24, %s36
      %s38 = ssub.s32 %s25, %s32
      %s39 = sor.u32 %s37, %s38
      %p40 = scmp.eq.s32.totalorder %s39, 0
      %s42 = sadd.s32 %s41, 1
      %s43 = scalar_select %p40, %s41, %s42
      %p46 = pneg %p40
      %p47 = scmp.eq.s32.totalorder %s17, 1
      %p48 = por %p46, %p47
      %p49 = scmp.ne.s32.totalorder %s41, %s44
      %p50 = scmp.eq.s32.totalorder %s17, 0
      %p51 = por %p49, %p50
      %p52 = scmp.ne.s32.totalorder %s41, %s44
      %p53 = scmp.eq.s32.totalorder %s22, 1
      %p54 = por %p52, %p53
      %p55 = scmp.ne.s32.totalorder %s44, %s45
      %p56 = scmp.eq.s32.totalorder %s22, 0
      %p57 = por %p55, %p56
      %p58 = scmp.ne.s32.totalorder %s44, %s45
      %p59 = scmp.eq.s32.totalorder %s23, 1
      %p60 = por %p58, %p59
      %p62 = scmp.ne.s32.totalorder %s45, %s61
      %p63 = scmp.eq.s32.totalorder %s23, 0
      %p64 = por %p62, %p63
      %s66 = sadd.s32 %s65, 1
      %p69 = scmp.eq.s32.totalorder %s17, 1
      %p70 = scmp.ne.s32.totalorder %s65, %s67
      %p71 = scmp.eq.s32.totalorder %s17, 0
      %p72 = por %p70, %p71
      %p73 = scmp.ne.s32.totalorder %s65, %s67
      %p74 = scmp.eq.s32.totalorder %s22, 1
      %p75 = por %p73, %p74
      %p76 = scmp.ne.s32.totalorder %s67, %s68
      %p77 = scmp.eq.s32.totalorder %s22, 0
      %p78 = por %p76, %p77
      %p79 = scmp.ne.s32.totalorder %s67, %s68
      %p80 = scmp.eq.s32.totalorder %s23, 1
      %p81 = por %p79, %p80
      %p83 = scmp.ne.s32.totalorder %s68, %s82
      %p84 = scmp.eq.s32.totalorder %s23, 0
      %p85 = por %p83, %p84
      %s87 = sadd.s32 %s86, 1
      %p90 = scmp.eq.s32.totalorder %s17, 1
      %p91 = scmp.ne.s32.totalorder %s86, %s88
      %p92 = scmp.eq.s32.totalorder %s17, 0
      %p93 = por %p91, %p92
      %p94 = scmp.ne.s32.totalorder %s86, %s88
      %p95 = scmp.eq.s32.totalorder %s22, 1
      %p96 = por %p94, %p95
      %p97 = scmp.ne.s32.totalorder %s88, %s89
      %p98 = scmp.eq.s32.totalorder %s22, 0
      %p99 = por %p97, %p98
      %p100 = scmp.ne.s32.totalorder %s88, %s89
      %p101 = scmp.eq.s32.totalorder %s23, 1
      %p102 = por %p100, %p101
      %p104 = scmp.ne.s32.totalorder %s89, %s103
      %p105 = scmp.eq.s32.totalorder %s23, 0
      %p106 = por %p104, %p105
      %s107 = ssub.s32 %s24, %s36
      %s108 = ssub.s32 %s25, %s32
      %s109 = sor.u32 %s107, %s108
      %p110 = scmp.eq.s32.totalorder %s109, 0
      %s112 = sadd.s32 %s111, 1
      %s113 = scalar_select %p110, %s111, %s112
      %p116 = pneg %p110
      %p117 = scmp.eq.s32.totalorder %s17, 1
      %p118 = por %p116, %p117
      %p119 = scmp.ne.s32.totalorder %s111, %s114
      %p120 = scmp.eq.s32.totalorder %s17, 0
      %p121 = por %p119, %p120
      %p122 = scmp.ne.s32.totalorder %s111, %s114
      %p123 = scmp.eq.s32.totalorder %s22, 1
      %p124 = por %p122, %p123
      %p125 = scmp.ne.s32.totalorder %s114, %s115
      %p126 = scmp.eq.s32.totalorder %s22, 0
      %p127 = por %p125, %p126
      %p128 = scmp.ne.s32.totalorder %s114, %s115
      %p129 = scmp.eq.s32.totalorder %s23, 1
      %p130 = por %p128, %p129
      %p132 = scmp.ne.s32.totalorder %s115, %s131
      %p133 = scmp.eq.s32.totalorder %s23, 0
      %p134 = por %p132, %p133
      %p135 = scmp.le.s32.totalorder 1, %s17
      %p136 = scmp.lt.s32.totalorder %s17, 3
      %p137 = pnand %p135, %p136
      %p138 = pneg %p137
      // Predicated region
      $region9: #{tpu_custom_call.1} parent=5 // pred_check
        _
      $region10: #{tpu_custom_call.1} parent=5 // pred_check_branch
        %140 = sbr.rel (%p137) target = $region12
      $region11: #{tpu_custom_call.1} parent=5 // pred_region
        %s141 = ssub.s32 %s17, 1
        // Predicated region
        $region13: #{tpu_custom_call.1} parent=11 // pred_check
          %p142 = pneg %p78
        $region14: #{tpu_custom_call.1} parent=11 // pred_check_branch
          %144 = sbr.rel (%p142) target = $region16
        $region15: #{tpu_custom_call.1} parent=11 // pred_region
          %s146 = ssub.s32 64, 64
          %147 = vsyncadd [#allocation5], %s146
          %150 = dma.hbm_to_smem %s1, 64, [#allocation7], [#allocation5]
        $region16: #{tpu_custom_call.1} parent=11 // pred_fallthru
          _
        // Predicated region
        $region17: #{tpu_custom_call.1} parent=11 // pred_check
          %p151 = pneg %p99
        $region18: #{tpu_custom_call.1} parent=11 // pred_check_branch
          %153 = sbr.rel (%p151) target = $region20
        $region19: #{tpu_custom_call.1} parent=11 // pred_region
          %s155 = ssub.s32 16, 16
          %156 = vsyncadd [#allocation6], %s155
          %s158 = sshll.u32 %s2, 4
          %s159 = int_to_ptr.vmem [resolvable:$true] %s158
          %161 = dma.vmem_to_smem %s159, 16, [#allocation8], [#allocation6]
        $region20: #{tpu_custom_call.1} parent=11 // pred_fallthru
          _
      $region12: #{tpu_custom_call.1} parent=5 // pred_fallthru
        _
      %p162 = scmp.lt.s32.totalorder %s17, 2
      // Predicated region
      $region21: #{tpu_custom_call.1} parent=5 // pred_check
        %p163 = pneg %p162
      $region22: #{tpu_custom_call.1} parent=5 // pred_check_branch
        %165 = sbr.rel (%p163) target = $region24
      $region23: #{tpu_custom_call.1} parent=5 // pred_region
        // Predicated region
        $region25: #{tpu_custom_call.1} parent=23 // pred_check
          %p166 = pneg %p51
        $region26: #{tpu_custom_call.1} parent=23 // pred_check_branch
          %168 = sbr.rel (%p166) target = $region28
        $region27: #{tpu_custom_call.1} parent=23 // pred_region
          %s169 = sand.u32 %s41, 1
          %s170 = scalar_lea.sflag [#allocation3], %s169
          %s171 = sand.u32 %s41, 1
          %s172 = smul.addr %s171, 16
          %s173 = scalar_lea.vmem [#allocation2], %s172
          %s174 = smul.u32 4, %s25
          %s176 = ssub.s32 256, 256
          %177 = vsyncadd %s170, %s176
          %s178 = smul.addr %s24, 4
          %s179 = sadd.s32 %s174, %s178
          %s180 = smul.addr %s179, 64
          %s181 = scalar_lea.hbm %s0, %s180
          %s183 = sshll.u32 %s173, 4
          %s184 = int_to_ptr.vmem [resolvable:$true] %s183
          %186 = dma.hbm_to_vmem [thread:$0]  %s181, 256, %s184, %s170
        $region28: #{tpu_custom_call.1} parent=23 // pred_fallthru
          _
      $region24: #{tpu_custom_call.1} parent=5 // pred_fallthru
        _
      %p187 = scmp.le.s32.totalorder 1, %s17
      %p188 = scmp.lt.s32.totalorder %s17, 3
      %p189 = pnand %p187, %p188
      %p190 = pneg %p189
      // Predicated region
      $region29: #{tpu_custom_call.1} parent=5 // pred_check
        _
      $region30: #{tpu_custom_call.1} parent=5 // pred_check_branch
        %192 = sbr.rel (%p189) target = $region32
      $region31: #{tpu_custom_call.1} parent=5 // pred_region
        %s193 = ssub.s32 %s17, 1
        %s194 = sand.u32 %s44, 1
        %s195 = scalar_lea.sflag [#allocation3], %s194
        %s196 = sand.u32 %s44, 1
        %s197 = smul.addr %s196, 16
        %s198 = scalar_lea.vmem [#allocation2], %s197
        // Predicated region
        $region33: #{tpu_custom_call.1} parent=31 // pred_check
          %p199 = pneg %p57
        $region34: #{tpu_custom_call.1} parent=31 // pred_check_branch
          %201 = sbr.rel (%p199) target = $region36
        $region35: #{tpu_custom_call.1} parent=31 // pred_region
          %202 = dma.done %s195, 256
        $region36: #{tpu_custom_call.1} parent=31 // pred_fallthru
          _
        // Predicated region
        $region37: #{tpu_custom_call.1} parent=31 // pred_check
          %p203 = pneg %p78
        $region38: #{tpu_custom_call.1} parent=31 // pred_check_branch
          %205 = sbr.rel (%p203) target = $region40
        $region39: #{tpu_custom_call.1} parent=31 // pred_region
          %206 = dma.done [#allocation5], 64
        $region40: #{tpu_custom_call.1} parent=31 // pred_fallthru
          _
        // Predicated region
        $region41: #{tpu_custom_call.1} parent=31 // pred_check
          %p207 = pneg %p99
        $region42: #{tpu_custom_call.1} parent=31 // pred_check_branch
          %209 = sbr.rel (%p207) target = $region44
        $region43: #{tpu_custom_call.1} parent=31 // pred_region
          %210 = dma.done [#allocation6], 16
        $region44: #{tpu_custom_call.1} parent=31 // pred_fallthru
          _
        %211 = sfence
        %s212 = sand.u32 %s44, 1
        %s213 = scalar_lea.sflag [#allocation3], %s212
        %s214 = sand.u32 %s44, 1
        %s215 = smul.addr %s214, 16
        %s216 = scalar_lea.vmem [#allocation2], %s215
        %p217 = pneg %p57
        %p218 = pneg %p54
        %p219 = pneg %p78
        %p220 = pneg %p75
        %p221 = pneg %p99
        %p222 = pneg %p96
        %p223 = pneg %p127
        %p224 = pneg %p124
        %s225 = sand.u32 %s114, 1
        %s226 = scalar_lea.sflag [#allocation4], %s225
        %s227 = sand.u32 %s114, 1
        %s228 = smul.addr %s227, 16
        %s229 = scalar_lea.vmem [#allocation9], %s228
        %s230 = smul.u32 4, %s27
        %s231 = smul.u32 4, %s27
        %v232 = vld [vmem:[%s198] sm:$0xff]
        %v233 = vld [vmem:[%s198 + $0x8] sm:$0xff]
        %s234 = sld [smem:[#allocation7]]
        %v235 = vstv %s234
        %v236 = vmul.f32 %v232, %v235
        %v237 = vmul.f32 %v233, %v235
        %s238 = sld [smem:[#allocation7 + $0x1]]
        %v239 = vstv %s238
        %v240 = vmul.f32 %v232, %v239
        %v241 = vmul.f32 %v233, %v239
        %v244 = vrot.slane %v240, 5
        %v245 = vrot.slane %v244, 4
        %v246 = vrot.slane %v241, 5
        %v247 = vrot.slane %v246, 4
        %v250 = vadd.f32 %v236, %v245
        %v251 = vadd.f32 %v237, %v247
        %s252 = sld [smem:[#allocation7 + $0x2]]
        %v253 = vstv %s252
        %v254 = vmul.f32 %v232, %v253
        %v255 = vmul.f32 %v233, %v253
        %v258 = vrot.slane %v254, 6
        %v259 = vrot.slane %v258, 4
        %v260 = vrot.slane %v255, 6
        %v261 = vrot.slane %v260, 4
        %v264 = vadd.f32 %v250, %v259
        %v265 = vadd.f32 %v251, %v261
        %s266 = sld [smem:[#allocation7 + $0x3]]
        %v267 = vstv %s266
        %v268 = vmul.f32 %v232, %v267
        %v269 = vmul.f32 %v233, %v267
        %v272 = vrot.slane %v268, 7
        %v273 = vrot.slane %v272, 4
        %v274 = vrot.slane %v269, 7
        %v275 = vrot.slane %v274, 4
        %v278 = vadd.f32 %v264, %v273
        %v279 = vadd.f32 %v265, %v275
        %s280 = sld [smem:[#allocation8]]
        %v281 = vstv %s280
        %v282 = vadd.f32 %v278, %v281
        %v283 = vadd.f32 %v279, %v281
        %v287 = vunpack.c.l.s4 1966171168
        %v288 = vunpack.c.0.s8 %v287
        %v289 = vlaneseq
        %v290 = vshrl.u32 %v289, 7
        %v291 = vsub.s32 %v288, %v290
        %v292 = vrot.slane %v282, %v291
        %v294 = vunpack.c.l.s4 1966171168
        %v295 = vunpack.c.0.s8 %v294
        %v296 = vlaneseq
        %v297 = vshrl.u32 %v296, 7
        %v298 = vsub.s32 %v295, %v297
        %v299 = vrot.slane %v283, %v298
        %v300 = vcombine.low %v292, %v299
        %v302 = vunpack.c.l.s4 1966171168
        %v303 = vunpack.c.0.s8 %v302
        %v304 = vlaneseq
        %v305 = vshrl.u32 %v304, 7
        %v306 = vsub.s32 %v303, %v305
        %v307 = vrot.slane %v300, %v306
        %v309 = vlaneseq
        %vm310 = vcmp.ge.s32.totalorder %v309, 0
        %vm311 = vcmp.lt.s32.totalorder %v309, 512
        %vm312 = vmand %vm310, %vm311
        %313 = vst.msk [vmem:[%s229] ss:$4 sm:$0xf] %vm312, %v307
        %s314 = sld [smem:[#allocation7 + $0x80]]
        %v315 = vstv %s314
        %v316 = vmul.f32 %v232, %v315
        %v317 = vmul.f32 %v233, %v315
        %s318 = sld [smem:[#allocation7 + $0x81]]
        %v319 = vstv %s318
        %v320 = vmul.f32 %v232, %v319
        %v321 = vmul.f32 %v233, %v319
        %v324 = vrot.slane %v320, 5
        %v325 = vrot.slane %v324, 4
        %v326 = vrot.slane %v321, 5
        %v327 = vrot.slane %v326, 4
        %v330 = vadd.f32 %v316, %v325
        %v331 = vadd.f32 %v317, %v327
        %s332 = sld [smem:[#allocation7 + $0x82]]
        %v333 = vstv %s332
        %v334 = vmul.f32 %v232, %v333
        %v335 = vmul.f32 %v233, %v333
        %v338 = vrot.slane %v334, 6
        %v339 = vrot.slane %v338, 4
        %v340 = vrot.slane %v335, 6
        %v341 = vrot.slane %v340, 4
        %v344 = vadd.f32 %v330, %v339
        %v345 = vadd.f32 %v331, %v341
        %s346 = sld [smem:[#allocation7 + $0x83]]
        %v347 = vstv %s346
        %v348 = vmul.f32 %v232, %v347
        %v349 = vmul.f32 %v233, %v347
        %v352 = vrot.slane %v348, 7
        %v353 = vrot.slane %v352, 4
        %v354 = vrot.slane %v349, 7
        %v355 = vrot.slane %v354, 4
        %v358 = vadd.f32 %v344, %v353
        %v359 = vadd.f32 %v345, %v355
        %s360 = sld [smem:[#allocation8 + $0x1]]
        %v361 = vstv %s360
        %v362 = vadd.f32 %v358, %v361
        %v363 = vadd.f32 %v359, %v361
        %v367 = vunpack.c.l.s4 1966171168
        %v368 = vunpack.c.0.s8 %v367
        %v369 = vlaneseq
        %v370 = vshrl.u32 %v369, 7
        %v371 = vsub.s32 %v368, %v370
        %v372 = vrot.slane %v362, %v371
        %v374 = vunpack.c.l.s4 1966171168
        %v375 = vunpack.c.0.s8 %v374
        %v376 = vlaneseq
        %v377 = vshrl.u32 %v376, 7
        %v378 = vsub.s32 %v375, %v377
        %v379 = vrot.slane %v363, %v378
        %v380 = vcombine.low %v372, %v379
        %v382 = vunpack.c.l.s4 1966171168
        %v383 = vunpack.c.0.s8 %v382
        %v384 = vlaneseq
        %v385 = vshrl.u32 %v384, 7
        %v386 = vsub.s32 %v383, %v385
        %v387 = vrot.slane %v380, %v386
        %s389 = scalar_lea.vmem %s229, 1 [#allocation9]
        %390 = vst.msk [vmem:[%s389] ss:$4 sm:$0xf] %vm312, %v387
        %s391 = sld [smem:[#allocation7 + $0x100]]
        %v392 = vstv %s391
        %v393 = vmul.f32 %v232, %v392
        %v394 = vmul.f32 %v233, %v392
        %s395 = sld [smem:[#allocation7 + $0x101]]
        %v396 = vstv %s395
        %v397 = vmul.f32 %v232, %v396
        %v398 = vmul.f32 %v233, %v396
        %v401 = vrot.slane %v397, 5
        %v402 = vrot.slane %v401, 4
        %v403 = vrot.slane %v398, 5
        %v404 = vrot.slane %v403, 4
        %v407 = vadd.f32 %v393, %v402
        %v408 = vadd.f32 %v394, %v404
        %s409 = sld [smem:[#allocation7 + $0x102]]
        %v410 = vstv %s409
        %v411 = vmul.f32 %v232, %v410
        %v412 = vmul.f32 %v233, %v410
        %v415 = vrot.slane %v411, 6
        %v416 = vrot.slane %v415, 4
        %v417 = vrot.slane %v412, 6
        %v418 = vrot.slane %v417, 4
        %v421 = vadd.f32 %v407, %v416
        %v422 = vadd.f32 %v408, %v418
        %s423 = sld [smem:[#allocation7 + $0x103]]
        %v424 = vstv %s423
        %v425 = vmul.f32 %v232, %v424
        %v426 = vmul.f32 %v233, %v424
        %v429 = vrot.slane %v425, 7
        %v430 = vrot.slane %v429, 4
        %v431 = vrot.slane %v426, 7
        %v432 = vrot.slane %v431, 4
        %v435 = vadd.f32 %v421, %v430
        %v436 = vadd.f32 %v422, %v432
        %s437 = sld [smem:[#allocation8 + $0x2]]
        %v438 = vstv %s437
        %v439 = vadd.f32 %v435, %v438
        %v440 = vadd.f32 %v436, %v438
        %v444 = vunpack.c.l.s4 1966171168
        %v445 = vunpack.c.0.s8 %v444
        %v446 = vlaneseq
        %v447 = vshrl.u32 %v446, 7
        %v448 = vsub.s32 %v445, %v447
        %v449 = vrot.slane %v439, %v448
        %v451 = vunpack.c.l.s4 1966171168
        %v452 = vunpack.c.0.s8 %v451
        %v453 = vlaneseq
        %v454 = vshrl.u32 %v453, 7
        %v455 = vsub.s32 %v452, %v454
        %v456 = vrot.slane %v440, %v455
        %v457 = vcombine.low %v449, %v456
        %v459 = vunpack.c.l.s4 1966171168
        %v460 = vunpack.c.0.s8 %v459
        %v461 = vlaneseq
        %v462 = vshrl.u32 %v461, 7
        %v463 = vsub.s32 %v460, %v462
        %v464 = vrot.slane %v457, %v463
        %s466 = scalar_lea.vmem %s229, 2 [#allocation9]
        %467 = vst.msk [vmem:[%s466] ss:$4 sm:$0xf] %vm312, %v464
        %s468 = sld [smem:[#allocation7 + $0x180]]
        %v469 = vstv %s468
        %v470 = vmul.f32 %v232, %v469
        %v471 = vmul.f32 %v233, %v469
        %s472 = sld [smem:[#allocation7 + $0x181]]
        %v473 = vstv %s472
        %v474 = vmul.f32 %v232, %v473
        %v475 = vmul.f32 %v233, %v473
        %v478 = vrot.slane %v474, 5
        %v479 = vrot.slane %v478, 4
        %v480 = vrot.slane %v475, 5
        %v481 = vrot.slane %v480, 4
        %v484 = vadd.f32 %v470, %v479
        %v485 = vadd.f32 %v471, %v481
        %s486 = sld [smem:[#allocation7 + $0x182]]
        %v487 = vstv %s486
        %v488 = vmul.f32 %v232, %v487
        %v489 = vmul.f32 %v233, %v487
        %v492 = vrot.slane %v488, 6
        %v493 = vrot.slane %v492, 4
        %v494 = vrot.slane %v489, 6
        %v495 = vrot.slane %v494, 4
        %v498 = vadd.f32 %v484, %v493
        %v499 = vadd.f32 %v485, %v495
        %s500 = sld [smem:[#allocation7 + $0x183]]
        %v501 = vstv %s500
        %v502 = vmul.f32 %v232, %v501
        %v503 = vmul.f32 %v233, %v501
        %v506 = vrot.slane %v502, 7
        %v507 = vrot.slane %v506, 4
        %v508 = vrot.slane %v503, 7
        %v509 = vrot.slane %v508, 4
        %v512 = vadd.f32 %v498, %v507
        %v513 = vadd.f32 %v499, %v509
        %s514 = sld [smem:[#allocation8 + $0x3]]
        %v515 = vstv %s514
        %v516 = vadd.f32 %v512, %v515
        %v517 = vadd.f32 %v513, %v515
        %v521 = vunpack.c.l.s4 1966171168
        %v522 = vunpack.c.0.s8 %v521
        %v523 = vlaneseq
        %v524 = vshrl.u32 %v523, 7
        %v525 = vsub.s32 %v522, %v524
        %v526 = vrot.slane %v516, %v525
        %v528 = vunpack.c.l.s4 1966171168
        %v529 = vunpack.c.0.s8 %v528
        %v530 = vlaneseq
        %v531 = vshrl.u32 %v530, 7
        %v532 = vsub.s32 %v529, %v531
        %v533 = vrot.slane %v517, %v532
        %v534 = vcombine.low %v526, %v533
        %v536 = vunpack.c.l.s4 1966171168
        %v537 = vunpack.c.0.s8 %v536
        %v538 = vlaneseq
        %v539 = vshrl.u32 %v538, 7
        %v540 = vsub.s32 %v537, %v539
        %v541 = vrot.slane %v534, %v540
        %s543 = scalar_lea.vmem %s229, 3 [#allocation9]
        %544 = vst.msk [vmem:[%s543] ss:$4 sm:$0xf] %vm312, %v541
        %s545 = sand.u32 %s114, 1
        %s546 = scalar_lea.sflag [#allocation4], %s545
        %s547 = sand.u32 %s114, 1
        %s548 = smul.addr %s547, 16
        %s549 = scalar_lea.vmem [#allocation9], %s548
        // Predicated region
        $region45: #{tpu_custom_call.1} parent=31 // pred_check
          %p550 = pneg %p124
        $region46: #{tpu_custom_call.1} parent=31 // pred_check_branch
          %552 = sbr.rel (%p550) target = $region48
        $region47: #{tpu_custom_call.1} parent=31 // pred_region
          %s553 = smul.u32 4, %s27
          %s555 = ssub.s32 256, 256
          %556 = vsyncadd %s546, %s555
          %s557 = smul.addr %s26, 4
          %s558 = sadd.s32 %s553, %s557
          %s559 = smul.addr %s558, 64
          %s560 = scalar_lea.hbm %s3, %s559
          %s562 = sshll.u32 %s549, 4
          %s563 = int_to_ptr.vmem [resolvable:$true] %s562
          %565 = dma.vmem_to_hbm [thread:$0]  %s563, 256, %s560, %s546
        $region48: #{tpu_custom_call.1} parent=31 // pred_fallthru
          _
      $region32: #{tpu_custom_call.1} parent=5 // pred_fallthru
        _
      %p566 = scmp.le.s32.totalorder 2, %s17
      // Predicated region
      $region49: #{tpu_custom_call.1} parent=5 // pred_check
        %p567 = pneg %p566
      $region50: #{tpu_custom_call.1} parent=5 // pred_check_branch
        %569 = sbr.rel (%p567) target = $region52
      $region51: #{tpu_custom_call.1} parent=5 // pred_region
        %s570 = ssub.s32 %s17, 2
        // Predicated region
        $region53: #{tpu_custom_call.1} parent=51 // pred_check
          %p571 = pneg %p130
        $region54: #{tpu_custom_call.1} parent=51 // pred_check_branch
          %573 = sbr.rel (%p571) target = $region56
        $region55: #{tpu_custom_call.1} parent=51 // pred_region
          %s574 = sand.u32 %s115, 1
          %s575 = scalar_lea.sflag [#allocation4], %s574
          %s576 = sand.u32 %s115, 1
          %s577 = smul.addr %s576, 16
          %s578 = scalar_lea.vmem [#allocation9], %s577
          %579 = dma.done %s575, 256
        $region56: #{tpu_custom_call.1} parent=51 // pred_fallthru
          _
      $region52: #{tpu_custom_call.1} parent=5 // pred_fallthru
        _
    $region6: #{tpu_custom_call.1} parent=1 // loop_footer
      %s21 = sadd.s32 1, %s17
    $region7: #{tpu_custom_call.1} parent=1 // loop_footer_branch
      %16 = sbr.rel target = $region3
    $region8: #{tpu_custom_call.1} parent=1 // loop_exit
      _
    %580 = vsyncpa [#allocation3], 1
    %s581 = scalar_lea.sflag [#allocation3], 1
    %582 = vsyncpa %s581, 1
    %583 = vsyncpa [#allocation4], 1
    %s584 = scalar_lea.sflag [#allocation4], 1
    %585 = vsyncpa %s584, 1
    %586 = vsyncpa [#allocation5], 1
    %s587 = scalar_lea.sflag [#allocation5], 1
    %588 = vsyncpa %s587, 1
    %589 = vsyncpa [#allocation6], 1
    %s590 = scalar_lea.sflag [#allocation6], 1
    %591 = vsyncpa %s590, 1

</llo_original>
